<compile_context>
chip_gen: v7x
topology: tpu7x:2x2x1
jax: 0.10.0
libtpu: 0.0.40
codegen_flags: <defaults>
</compile_context>

<pallas_src>
from functools import partial

import jax
import jax.numpy as jnp
from jax.experimental import pallas as pl
from jax.experimental.pallas import tpu as pltpu


def _round_up(x, m):
    return (x + m - 1) // m * m


# ---------------------------------------------------------------------------
# Kernel
# ---------------------------------------------------------------------------
def _fusdiff_kernel(xb_ref, xa_ref,
                    w1a_ref, w1b_ref, b1_ref,
                    w2a_ref, w2b_ref, b2_ref,
                    wfa_ref, wfb_ref, wfc_ref, bf_ref,
                    out_ref):
    f32 = jnp.float32

    xb_f32 = xb_ref[...]                       # (tm, D) f32 straight from HBM
    xa_f32 = xa_ref[...]

    cdt = w1a_ref.dtype                        # compute dtype (bf16)
    # f32 VPU multiply (v5e has no bf16 VALU), then one cast per MXU operand.
    h = (xb_f32 * xa_f32).astype(cdt)          # x_before * x_after
    xb = xb_f32.astype(cdt)
    xa = xa_f32.astype(cdt)

    # fc1 / fc2: cat(h, x) @ W  ==  h @ W[:D] + x @ W[D:]   (f32 accumulate)
    pre1 = (jnp.dot(h, w1a_ref[...], preferred_element_type=f32)
            + jnp.dot(xb, w1b_ref[...], preferred_element_type=f32)
            + b1_ref[...])
    pre2 = (jnp.dot(h, w2a_ref[...], preferred_element_type=f32)
            + jnp.dot(xa, w2b_ref[...], preferred_element_type=f32)
            + b2_ref[...])
    xb_ = jnp.maximum(pre1, 0.0)               # ReLU(fc1), f32
    xa_ = jnp.maximum(pre2, 0.0)               # ReLU(fc2), f32
    # Note: x_diff is a difference of two ReLU'd values; keep it f32 until the
    # single cast needed for the bf16 MXU pass.
    x_diff = (xa_ - xb_).astype(cdt)

    # Final fc: cat(x_before, x_diff, x_after) @ W as three accumulating dots
    # (no (tm, 3D) concat copy in VMEM).
    out = (jnp.dot(xb, wfa_ref[...], preferred_element_type=f32)
           + jnp.dot(x_diff, wfb_ref[...], preferred_element_type=f32)
           + jnp.dot(xa, wfc_ref[...], preferred_element_type=f32)
           + bf_ref[...])
    out_ref[...] = jnp.maximum(out, 0.0).astype(out_ref.dtype)


# ---------------------------------------------------------------------------
# Weight packing (exact re-arrangement of the PyTorch Linear weights)
# ---------------------------------------------------------------------------
def pack_params(params, D, compute_dtype):
    """Split the concat-linear weights into per-operand blocks (one-time, tiny)."""
    w1, b1, w2, b2, w, b = params
    cast = lambda a: a.astype(compute_dtype)
    row = lambda v: v.reshape(1, -1).astype(jnp.float32)
    return (cast(w1[:D]), cast(w1[D:]), row(b1),          # fc1
            cast(w2[:D]), cast(w2[D:]), row(b2),          # fc2
            cast(w[:D]), cast(w[D:2 * D]), cast(w[2 * D:]), row(b))  # fc


# ---------------------------------------------------------------------------
# Wrapper
# ---------------------------------------------------------------------------
@partial(jax.jit, static_argnames=("tm", "compute_dtype", "out_dtype"))
def fusdiff_forward(x_before, x_after, params, *, tm=512,
                    compute_dtype=jnp.bfloat16, out_dtype=jnp.bfloat16):
    """params = (w1 (2D,D), b1 (D,), w2 (2D,D), b2 (D,), w (3D,D), b (D,))."""
    B, N, D = x_before.shape
    M = B * N

    # Row tile: multiple of 16 (bf16 sublane packing of the output), and at
    # least two grid steps once M allows it so v7x's two TensorCores both get
    # work under dimension_semantics=("parallel",).
    tm_eff = int(min(tm, max(16, _round_up(-(-M // 2), 16))))
    grid_m = -(-M // tm_eff)          # ragged last block: reads padded, writes masked

    xb2 = x_before.reshape(M, D)      # free reshape — no HBM pad/cast pre-pass
    xa2 = x_after.reshape(M, D)
    packed = pack_params(params, D, compute_dtype)

    # VMEM budget from the actual footprint (v7x only has 64 MiB physical).
    c_sz = jnp.dtype(compute_dtype).itemsize
    o_sz = jnp.dtype(out_dtype).itemsize
    in_sz = jnp.dtype(x_before.dtype).itemsize
    w_bytes = 7 * D * D * c_sz + 4 * D * 4            # weights + biases
    act_bytes = tm_eff * D * (2 * in_sz + o_sz)       # per pipeline buffer
    # Single-buffer the grid-invariant weights once they are big enough to
    # matter: double-buffering buys nothing for a constant index_map and at
    # large D it is the difference between fitting v7x VMEM or not.
    single_buffer_w = w_bytes > (1 << 20)
    w_bufs = 1 if single_buffer_w else 2
    vmem_limit = int(min(max(w_bufs * w_bytes + 2 * act_bytes + (8 << 20),
                             16 << 20), 56 << 20))
    # TODO(synk): if w_bufs * w_bytes ever approaches the 56 MiB cap, tile the
    # weights over a K-reduction grid axis instead of holding them resident.

    row_spec = pl.BlockSpec((tm_eff, D), lambda i: (i, 0))

    def const(shape):
        # Grid-invariant operand: constant index_map -> DMA'd once.
        if single_buffer_w:
            return pl.BlockSpec(shape, lambda i: (0, 0),
                                pipeline_mode=pl.Buffered(1))
        return pl.BlockSpec(shape, lambda i: (0, 0))

    out = pl.pallas_call(
        _fusdiff_kernel,
        out_shape=jax.ShapeDtypeStruct((M, D), out_dtype),
        grid=(grid_m,),
        in_specs=[row_spec, row_spec,
                  const((D, D)), const((D, D)), const((1, D)),
                  const((D, D)), const((D, D)), const((1, D)),
                  const((D, D)), const((D, D)), const((D, D)), const((1, D))],
        out_specs=row_spec,
        compiler_params=pltpu.CompilerParams(
            dimension_semantics=("parallel",),
            vmem_limit_bytes=vmem_limit),
    )(xb2, xa2, *packed)

    return out.reshape(B, N, D)


# ---------------------------------------------------------------------------
# Init + references
# ---------------------------------------------------------------------------
def init_params(key, D):
    """PyTorch-like uniform init; weights stored transposed as (in, out)."""
    ks = jax.random.split(key, 6)
    s2 = 1.0 / jnp.sqrt(2.0 * D)   # fc1/fc2 fan_in = 2D
    s3 = 1.0 / jnp.sqrt(3.0 * D)   # fc    fan_in = 3D
    w1 = jax.random.uniform(ks[0], (2 * D, D), jnp.float32, -s2, s2)
    b1 = jax.random.uniform(ks[1], (D,), jnp.float32, -s2, s2)
    w2 = jax.random.uniform(ks[2], (2 * D, D), jnp.float32, -s2, s2)
    b2 = jax.random.uniform(ks[3], (D,), jnp.float32, -s2, s2)
    w = jax.random.uniform(ks[4], (3 * D, D), jnp.float32, -s3, s3)
    b = jax.random.uniform(ks[5], (D,), jnp.float32, -s3, s3)
    return w1, b1, w2, b2, w, b


def fusdiff_reference_f32(x_before, x_after, params):
    """Pure-f32 JAX mirror of the PyTorch forward."""
    w1, b1, w2, b2, w, b = params
    h = x_before * x_after
    xb_ = jax.nn.relu(jnp.concatenate([h, x_before], -1) @ w1 + b1)
    xa_ = jax.nn.relu(jnp.concatenate([h, x_after], -1) @ w2 + b2)
    x_diff = xa_ - xb_
    x = jnp.concatenate([x_before, x_diff, x_after], -1)
    return jax.nn.relu(x @ w + b)


def fusdiff_reference_matched(x_before, x_after, params,
                              compute_dtype=jnp.bfloat16,
                              out_dtype=jnp.bfloat16):
    """Reference mirroring the kernel's bf16-operand / f32-accumulate numerics."""
    w1, b1, w2, b2, w, b = params
    D = x_before.shape[-1]
    f32 = jnp.float32
    h = (x_before * x_after).astype(compute_dtype)
    xb = x_before.astype(compute_dtype)
    xa = x_after.astype(compute_dtype)
    pre1 = (jnp.dot(h, w1[:D].astype(compute_dtype), preferred_element_type=f32)
            + jnp.dot(xb, w1[D:].astype(compute_dtype), preferred_element_type=f32)
            + b1)
    pre2 = (jnp.dot(h, w2[:D].astype(compute_dtype), preferred_element_type=f32)
            + jnp.dot(xa, w2[D:].astype(compute_dtype), preferred_element_type=f32)
            + b2)
    xb_ = jax.nn.relu(pre1)
    xa_ = jax.nn.relu(pre2)
    x_diff = (xa_ - xb_).astype(compute_dtype)
    out = (jnp.dot(xb, w[:D].astype(compute_dtype), preferred_element_type=f32)
           + jnp.dot(x_diff, w[D:2 * D].astype(compute_dtype), preferred_element_type=f32)
           + jnp.dot(xa, w[2 * D:].astype(compute_dtype), preferred_element_type=f32)
           + b)
    return jax.nn.relu(out).astype(out_dtype)


if __name__ == "__main__":
    B, N, D = 2, 8, 32   # batch=2, seq=8, embed_dim = img_channel = 32
    key = jax.random.PRNGKey(0)
    k1, k2, k3 = jax.random.split(key, 3)
    x_before = jax.random.normal(k1, (B, N, D), jnp.float32)
    x_after = jax.random.normal(k2, (B, N, D), jnp.float32)
    params = init_params(k3, D)

    out = fusdiff_forward(x_before, x_after, params)
    jax.block_until_ready(out)

    ref_matched = fusdiff_reference_matched(x_before, x_after, params)
    ref_f32 = fusdiff_reference_f32(x_before, x_after, params)

    assert out.shape == (B, N, D)
    assert out.dtype == jnp.bfloat16
    assert jnp.allclose(out.astype(jnp.float32), ref_matched.astype(jnp.float32),
                        atol=2e-2, rtol=2e-2), "mismatch vs bf16-matched reference"
    assert jnp.allclose(out.astype(jnp.float32), ref_f32,
                        atol=1.5e-1, rtol=5e-2), "mismatch vs f32 reference"
    print("KERNEL_OK")
</pallas_src>

<mosaic_0001>
module attributes {stable_mosaic.version = 11 : i64} {
  func.func @_fusdiff_kernel(%arg0: i32, %arg1: memref<16x32xf32, #tpu.memory_space<vmem>>, %arg2: memref<16x32xf32, #tpu.memory_space<vmem>>, %arg3: memref<32x32xbf16, #tpu.memory_space<vmem>>, %arg4: memref<32x32xbf16, #tpu.memory_space<vmem>>, %arg5: memref<1x32xf32, #tpu.memory_space<vmem>>, %arg6: memref<32x32xbf16, #tpu.memory_space<vmem>>, %arg7: memref<32x32xbf16, #tpu.memory_space<vmem>>, %arg8: memref<1x32xf32, #tpu.memory_space<vmem>>, %arg9: memref<32x32xbf16, #tpu.memory_space<vmem>>, %arg10: memref<32x32xbf16, #tpu.memory_space<vmem>>, %arg11: memref<32x32xbf16, #tpu.memory_space<vmem>>, %arg12: memref<1x32xf32, #tpu.memory_space<vmem>>, %arg13: memref<16x32xbf16, #tpu.memory_space<vmem>>) attributes {dimension_semantics = [#tpu.dimension_semantics<parallel>], iteration_bounds = array<i64: 1>, scalar_prefetch = 0 : i64, scratch_operands = 0 : i64, tpu.core_type = #tpu.core_type<tc>, window_params = [{transform_indices = @transform_0, window_bounds = array<i64: 16, 32>}, {transform_indices = @transform_1, window_bounds = array<i64: 16, 32>}, {pipeline_mode = #tpu.pipeline_mode<synchronous>, transform_indices = @transform_2, window_bounds = array<i64: 32, 32>}, {pipeline_mode = #tpu.pipeline_mode<synchronous>, transform_indices = @transform_3, window_bounds = array<i64: 32, 32>}, {pipeline_mode = #tpu.pipeline_mode<synchronous>, transform_indices = @transform_4, window_bounds = array<i64: 1, 32>}, {pipeline_mode = #tpu.pipeline_mode<synchronous>, transform_indices = @transform_5, window_bounds = array<i64: 32, 32>}, {pipeline_mode = #tpu.pipeline_mode<synchronous>, transform_indices = @transform_6, window_bounds = array<i64: 32, 32>}, {pipeline_mode = #tpu.pipeline_mode<synchronous>, transform_indices = @transform_7, window_bounds = array<i64: 1, 32>}, {pipeline_mode = #tpu.pipeline_mode<synchronous>, transform_indices = @transform_8, window_bounds = array<i64: 32, 32>}, {pipeline_mode = #tpu.pipeline_mode<synchronous>, transform_indices = @transform_9, window_bounds = array<i64: 32, 32>}, {pipeline_mode = #tpu.pipeline_mode<synchronous>, transform_indices = @transform_10, window_bounds = array<i64: 32, 32>}, {pipeline_mode = #tpu.pipeline_mode<synchronous>, transform_indices = @transform_11, window_bounds = array<i64: 1, 32>}, {transform_indices = @transform_12, window_bounds = array<i64: 16, 32>}]} {
    %c0 = arith.constant 0 : index
    %c0_0 = arith.constant 0 : index
    %0 = vector.load %arg1[%c0, %c0_0] : memref<16x32xf32, #tpu.memory_space<vmem>>, vector<16x32xf32>
    %c0_1 = arith.constant 0 : index
    %c0_2 = arith.constant 0 : index
    %1 = vector.load %arg2[%c0_1, %c0_2] : memref<16x32xf32, #tpu.memory_space<vmem>>, vector<16x32xf32>
    %2 = arith.mulf %0, %1 : vector<16x32xf32>
    %3 = arith.truncf %2 : vector<16x32xf32> to vector<16x32xbf16>
    %4 = arith.truncf %0 : vector<16x32xf32> to vector<16x32xbf16>
    %5 = arith.truncf %1 : vector<16x32xf32> to vector<16x32xbf16>
    %c0_3 = arith.constant 0 : index
    %c0_4 = arith.constant 0 : index
    %6 = vector.load %arg3[%c0_3, %c0_4] : memref<32x32xbf16, #tpu.memory_space<vmem>>, vector<32x32xbf16>
    %cst = arith.constant dense<0.000000e+00> : vector<16x32xf32>
    %7 = tpu.matmul %3, %6, %cst {dimension_numbers = #tpu.dot_dimension_numbers<[1], [0], [0], [1], [0, 0, 1, 1], [], []>} : vector<16x32xbf16>, vector<32x32xbf16>, vector<16x32xf32> -> vector<16x32xf32>
    %c0_5 = arith.constant 0 : index
    %c0_6 = arith.constant 0 : index
    %8 = vector.load %arg4[%c0_5, %c0_6] : memref<32x32xbf16, #tpu.memory_space<vmem>>, vector<32x32xbf16>
    %cst_7 = arith.constant dense<0.000000e+00> : vector<16x32xf32>
    %9 = tpu.matmul %4, %8, %cst_7 {dimension_numbers = #tpu.dot_dimension_numbers<[1], [0], [0], [1], [0, 0, 1, 1], [], []>} : vector<16x32xbf16>, vector<32x32xbf16>, vector<16x32xf32> -> vector<16x32xf32>
    %10 = arith.addf %7, %9 : vector<16x32xf32>
    %c0_8 = arith.constant 0 : index
    %c0_9 = arith.constant 0 : index
    %11 = vector.load %arg5[%c0_8, %c0_9] : memref<1x32xf32, #tpu.memory_space<vmem>>, vector<1x32xf32>
    %12 = vector.broadcast %11 : vector<1x32xf32> to vector<16x32xf32>
    %13 = arith.addf %10, %12 : vector<16x32xf32>
    %c0_10 = arith.constant 0 : index
    %c0_11 = arith.constant 0 : index
    %14 = vector.load %arg6[%c0_10, %c0_11] : memref<32x32xbf16, #tpu.memory_space<vmem>>, vector<32x32xbf16>
    %cst_12 = arith.constant dense<0.000000e+00> : vector<16x32xf32>
    %15 = tpu.matmul %3, %14, %cst_12 {dimension_numbers = #tpu.dot_dimension_numbers<[1], [0], [0], [1], [0, 0, 1, 1], [], []>} : vector<16x32xbf16>, vector<32x32xbf16>, vector<16x32xf32> -> vector<16x32xf32>
    %c0_13 = arith.constant 0 : index
    %c0_14 = arith.constant 0 : index
    %16 = vector.load %arg7[%c0_13, %c0_14] : memref<32x32xbf16, #tpu.memory_space<vmem>>, vector<32x32xbf16>
    %cst_15 = arith.constant dense<0.000000e+00> : vector<16x32xf32>
    %17 = tpu.matmul %5, %16, %cst_15 {dimension_numbers = #tpu.dot_dimension_numbers<[1], [0], [0], [1], [0, 0, 1, 1], [], []>} : vector<16x32xbf16>, vector<32x32xbf16>, vector<16x32xf32> -> vector<16x32xf32>
    %18 = arith.addf %15, %17 : vector<16x32xf32>
    %c0_16 = arith.constant 0 : index
    %c0_17 = arith.constant 0 : index
    %19 = vector.load %arg8[%c0_16, %c0_17] : memref<1x32xf32, #tpu.memory_space<vmem>>, vector<1x32xf32>
    %20 = vector.broadcast %19 : vector<1x32xf32> to vector<16x32xf32>
    %21 = arith.addf %18, %20 : vector<16x32xf32>
    %cst_18 = arith.constant 0.000000e+00 : f32
    %22 = vector.broadcast %cst_18 : f32 to vector<16x32xf32>
    %23 = arith.maximumf %13, %22 : vector<16x32xf32>
    %cst_19 = arith.constant 0.000000e+00 : f32
    %24 = vector.broadcast %cst_19 : f32 to vector<16x32xf32>
    %25 = arith.maximumf %21, %24 : vector<16x32xf32>
    %26 = arith.subf %25, %23 : vector<16x32xf32>
    %27 = arith.truncf %26 : vector<16x32xf32> to vector<16x32xbf16>
    %c0_20 = arith.constant 0 : index
    %c0_21 = arith.constant 0 : index
    %28 = vector.load %arg9[%c0_20, %c0_21] : memref<32x32xbf16, #tpu.memory_space<vmem>>, vector<32x32xbf16>
    %cst_22 = arith.constant dense<0.000000e+00> : vector<16x32xf32>
    %29 = tpu.matmul %4, %28, %cst_22 {dimension_numbers = #tpu.dot_dimension_numbers<[1], [0], [0], [1], [0, 0, 1, 1], [], []>} : vector<16x32xbf16>, vector<32x32xbf16>, vector<16x32xf32> -> vector<16x32xf32>
    %c0_23 = arith.constant 0 : index
    %c0_24 = arith.constant 0 : index
    %30 = vector.load %arg10[%c0_23, %c0_24] : memref<32x32xbf16, #tpu.memory_space<vmem>>, vector<32x32xbf16>
    %cst_25 = arith.constant dense<0.000000e+00> : vector<16x32xf32>
    %31 = tpu.matmul %27, %30, %cst_25 {dimension_numbers = #tpu.dot_dimension_numbers<[1], [0], [0], [1], [0, 0, 1, 1], [], []>} : vector<16x32xbf16>, vector<32x32xbf16>, vector<16x32xf32> -> vector<16x32xf32>
    %32 = arith.addf %29, %31 : vector<16x32xf32>
    %c0_26 = arith.constant 0 : index
    %c0_27 = arith.constant 0 : index
    %33 = vector.load %arg11[%c0_26, %c0_27] : memref<32x32xbf16, #tpu.memory_space<vmem>>, vector<32x32xbf16>
    %cst_28 = arith.constant dense<0.000000e+00> : vector<16x32xf32>
    %34 = tpu.matmul %5, %33, %cst_28 {dimension_numbers = #tpu.dot_dimension_numbers<[1], [0], [0], [1], [0, 0, 1, 1], [], []>} : vector<16x32xbf16>, vector<32x32xbf16>, vector<16x32xf32> -> vector<16x32xf32>
    %35 = arith.addf %32, %34 : vector<16x32xf32>
    %c0_29 = arith.constant 0 : index
    %c0_30 = arith.constant 0 : index
    %36 = vector.load %arg12[%c0_29, %c0_30] : memref<1x32xf32, #tpu.memory_space<vmem>>, vector<1x32xf32>
    %37 = vector.broadcast %36 : vector<1x32xf32> to vector<16x32xf32>
    %38 = arith.addf %35, %37 : vector<16x32xf32>
    %cst_31 = arith.constant 0.000000e+00 : f32
    %39 = vector.broadcast %cst_31 : f32 to vector<16x32xf32>
    %40 = arith.maximumf %38, %39 : vector<16x32xf32>
    %41 = arith.truncf %40 : vector<16x32xf32> to vector<16x32xbf16>
    %c0_32 = arith.constant 0 : index
    %c0_33 = arith.constant 0 : index
    %42 = vector.load %arg13[%c0_32, %c0_33] : memref<16x32xbf16, #tpu.memory_space<vmem>>, vector<16x32xbf16>
    tpu.vector_store %arg13[%c0_32, %c0_33], %41 {strides = array<i32>} : memref<16x32xbf16, #tpu.memory_space<vmem>>, vector<16x32xbf16>,
    return
  }
  func.func @transform_0(%arg0: i32) -> (i32, i32) {
    %c0_i32 = arith.constant 0 : i32
    %c0_i32_0 = arith.constant 0 : i32
    return %arg0, %c0_i32 : i32, i32
  }
  func.func @transform_1(%arg0: i32) -> (i32, i32) {
    %c0_i32 = arith.constant 0 : i32
    %c0_i32_0 = arith.constant 0 : i32
    return %arg0, %c0_i32 : i32, i32
  }
  func.func @transform_2(%arg0: i32) -> (i32, i32) {
    %c0_i32 = arith.constant 0 : i32
    %c0_i32_0 = arith.constant 0 : i32
    %c0_i32_1 = arith.constant 0 : i32
    return %c0_i32, %c0_i32_0 : i32, i32
  }
  func.func @transform_3(%arg0: i32) -> (i32, i32) {
    %c0_i32 = arith.constant 0 : i32
    %c0_i32_0 = arith.constant 0 : i32
    %c0_i32_1 = arith.constant 0 : i32
    return %c0_i32, %c0_i32_0 : i32, i32
  }
  func.func @transform_4(%arg0: i32) -> (i32, i32) {
    %c0_i32 = arith.constant 0 : i32
    %c0_i32_0 = arith.constant 0 : i32
    %c0_i32_1 = arith.constant 0 : i32
    return %c0_i32, %c0_i32_0 : i32, i32
  }
  func.func @transform_5(%arg0: i32) -> (i32, i32) {
    %c0_i32 = arith.constant 0 : i32
    %c0_i32_0 = arith.constant 0 : i32
    %c0_i32_1 = arith.constant 0 : i32
    return %c0_i32, %c0_i32_0 : i32, i32
  }
  func.func @transform_6(%arg0: i32) -> (i32, i32) {
    %c0_i32 = arith.constant 0 : i32
    %c0_i32_0 = arith.constant 0 : i32
    %c0_i32_1 = arith.constant 0 : i32
    return %c0_i32, %c0_i32_0 : i32, i32
  }
  func.func @transform_7(%arg0: i32) -> (i32, i32) {
    %c0_i32 = arith.constant 0 : i32
    %c0_i32_0 = arith.constant 0 : i32
    %c0_i32_1 = arith.constant 0 : i32
    return %c0_i32, %c0_i32_0 : i32, i32
  }
  func.func @transform_8(%arg0: i32) -> (i32, i32) {
    %c0_i32 = arith.constant 0 : i32
    %c0_i32_0 = arith.constant 0 : i32
    %c0_i32_1 = arith.constant 0 : i32
    return %c0_i32, %c0_i32_0 : i32, i32
  }
  func.func @transform_9(%arg0: i32) -> (i32, i32) {
    %c0_i32 = arith.constant 0 : i32
    %c0_i32_0 = arith.constant 0 : i32
    %c0_i32_1 = arith.constant 0 : i32
    return %c0_i32, %c0_i32_0 : i32, i32
  }
  func.func @transform_10(%arg0: i32) -> (i32, i32) {
    %c0_i32 = arith.constant 0 : i32
    %c0_i32_0 = arith.constant 0 : i32
    %c0_i32_1 = arith.constant 0 : i32
    return %c0_i32, %c0_i32_0 : i32, i32
  }
  func.func @transform_11(%arg0: i32) -> (i32, i32) {
    %c0_i32 = arith.constant 0 : i32
    %c0_i32_0 = arith.constant 0 : i32
    %c0_i32_1 = arith.constant 0 : i32
    return %c0_i32, %c0_i32_0 : i32, i32
  }
  func.func @transform_12(%arg0: i32) -> (i32, i32) {
    %c0_i32 = arith.constant 0 : i32
    %c0_i32_0 = arith.constant 0 : i32
    return %arg0, %c0_i32 : i32, i32
  }
}

</mosaic_0001>

<llo_original>
// kernel: fusdiff_forward.1
$region0: #{fusdiff_forward.1}
  #allocation0 [shape = 'u32[]', space=smem, size = 0x4, offset = 0x4, fixed_abs, tag = 'smem constant byte address 0x4 - core index']
  #allocation1 [shape = 'u32[144,128]{1,0:T(1,128)}', space=vmem, size = 0x12000, scoped, tag = 'internal scratch']
  %s0 = inlined_call_operand.vmem [shape: f32[16,32], index: 0, kind: input, shape index: {}]
  %s1 = inlined_call_operand.vmem [shape: f32[16,32], index: 1, kind: input, shape index: {}]
  %s2 = inlined_call_operand.vmem [shape: bf16[32,32], index: 2, kind: input, shape index: {}]
  %s3 = inlined_call_operand.vmem [shape: bf16[32,32], index: 3, kind: input, shape index: {}]
  %s4 = inlined_call_operand.vmem [shape: f32[1,32], index: 4, kind: input, shape index: {}]
  %s5 = inlined_call_operand.vmem [shape: bf16[32,32], index: 5, kind: input, shape index: {}]
  %s6 = inlined_call_operand.vmem [shape: bf16[32,32], index: 6, kind: input, shape index: {}]
  %s7 = inlined_call_operand.vmem [shape: f32[1,32], index: 7, kind: input, shape index: {}]
  %s8 = inlined_call_operand.vmem [shape: bf16[32,32], index: 8, kind: input, shape index: {}]
  %s9 = inlined_call_operand.vmem [shape: bf16[32,32], index: 9, kind: input, shape index: {}]
  %s10 = inlined_call_operand.vmem [shape: bf16[32,32], index: 10, kind: input, shape index: {}]
  %s11 = inlined_call_operand.vmem [shape: f32[1,32], index: 11, kind: input, shape index: {}]
  %s12 = inlined_call_operand.hbm [shape: bf16[16,32], index: 12, kind: output, shape index: {}]
  %s13 = sld [smem:[#allocation0]]
  $region58: #{fusdiff_forward.1} parent=0
    _
  %s15 = ssub.s32 1, %s13
  %s16 = scalar_select 0, %s15, %s13
  $region1: #{fusdiff_forward.1} parent=0
    #allocation2 [shape = 'u8[4096]{0}', space=vmem, size = 0x1000, scoped, tag = 'output window, operand 0, single buffered']
    #allocation3 [shape = 's32[1]{0}', space=sflag, size = 0x4, scoped, tag = 'scoped memory for fusdiff_forward.1']
    %17 = vsyncpa [#allocation3], 0
    // Predicated region
    $region2: #{fusdiff_forward.1} parent=1 // pred_check
      _
    $region3: #{fusdiff_forward.1} parent=1 // pred_check_branch
      %19 = sbr.rel (0) target = $region5
    $region4: #{fusdiff_forward.1} parent=1 // pred_region
      _
    $region5: #{fusdiff_forward.1} parent=1 // pred_fallthru
      _
    // Predicated region
    $region6: #{fusdiff_forward.1} parent=1 // pred_check
      _
    $region7: #{fusdiff_forward.1} parent=1 // pred_check_branch
      %21 = sbr.rel (0) target = $region9
    $region8: #{fusdiff_forward.1} parent=1 // pred_region
      _
    $region9: #{fusdiff_forward.1} parent=1 // pred_fallthru
      _
    // Predicated region
    $region10: #{fusdiff_forward.1} parent=1 // pred_check
      _
    $region11: #{fusdiff_forward.1} parent=1 // pred_check_branch
      %23 = sbr.rel (0) target = $region13
    $region12: #{fusdiff_forward.1} parent=1 // pred_region
      _
    $region13: #{fusdiff_forward.1} parent=1 // pred_fallthru
      _
    // Predicated region
    $region14: #{fusdiff_forward.1} parent=1 // pred_check
      _
    $region15: #{fusdiff_forward.1} parent=1 // pred_check_branch
      %25 = sbr.rel (0) target = $region17
    $region16: #{fusdiff_forward.1} parent=1 // pred_region
      _
    $region17: #{fusdiff_forward.1} parent=1 // pred_fallthru
      _
    // Predicated region
    $region18: #{fusdiff_forward.1} parent=1 // pred_check
      _
    $region19: #{fusdiff_forward.1} parent=1 // pred_check_branch
      %27 = sbr.rel (0) target = $region21
    $region20: #{fusdiff_forward.1} parent=1 // pred_region
      _
    $region21: #{fusdiff_forward.1} parent=1 // pred_fallthru
      _
    // Predicated region
    $region22: #{fusdiff_forward.1} parent=1 // pred_check
      _
    $region23: #{fusdiff_forward.1} parent=1 // pred_check_branch
      %29 = sbr.rel (0) target = $region25
    $region24: #{fusdiff_forward.1} parent=1 // pred_region
      _
    $region25: #{fusdiff_forward.1} parent=1 // pred_fallthru
      _
    // Predicated region
    $region26: #{fusdiff_forward.1} parent=1 // pred_check
      _
    $region27: #{fusdiff_forward.1} parent=1 // pred_check_branch
      %31 = sbr.rel (0) target = $region29
    $region28: #{fusdiff_forward.1} parent=1 // pred_region
      _
    $region29: #{fusdiff_forward.1} parent=1 // pred_fallthru
      _
    // Predicated region
    $region30: #{fusdiff_forward.1} parent=1 // pred_check
      _
    $region31: #{fusdiff_forward.1} parent=1 // pred_check_branch
      %33 = sbr.rel (0) target = $region33
    $region32: #{fusdiff_forward.1} parent=1 // pred_region
      _
    $region33: #{fusdiff_forward.1} parent=1 // pred_fallthru
      _
    // Predicated region
    $region34: #{fusdiff_forward.1} parent=1 // pred_check
      _
    $region35: #{fusdiff_forward.1} parent=1 // pred_check_branch
      %35 = sbr.rel (0) target = $region37
    $region36: #{fusdiff_forward.1} parent=1 // pred_region
      _
    $region37: #{fusdiff_forward.1} parent=1 // pred_fallthru
      _
    // Predicated region
    $region38: #{fusdiff_forward.1} parent=1 // pred_check
      _
    $region39: #{fusdiff_forward.1} parent=1 // pred_check_branch
      %37 = sbr.rel (0) target = $region41
    $region40: #{fusdiff_forward.1} parent=1 // pred_region
      _
    $region41: #{fusdiff_forward.1} parent=1 // pred_fallthru
      _
    // Predicated region
    $region42: #{fusdiff_forward.1} parent=1 // pred_check
      _
    $region43: #{fusdiff_forward.1} parent=1 // pred_check_branch
      %39 = sbr.rel (0) target = $region45
    $region44: #{fusdiff_forward.1} parent=1 // pred_region
      _
    $region45: #{fusdiff_forward.1} parent=1 // pred_fallthru
      _
    // Predicated region
    $region46: #{fusdiff_forward.1} parent=1 // pred_check
      _
    $region47: #{fusdiff_forward.1} parent=1 // pred_check_branch
      %41 = sbr.rel (0) target = $region49
    $region48: #{fusdiff_forward.1} parent=1 // pred_region
      _
    $region49: #{fusdiff_forward.1} parent=1 // pred_fallthru
      _
    %v43 = vld [vmem:[%s0] sm:$0xff]
    %v44 = vld [vmem:[%s0 + $0x8] sm:$0xff]
    %v45 = vld [vmem:[%s1] sm:$0xff]
    %v46 = vld [vmem:[%s1 + $0x8] sm:$0xff]
    %v47 = vmul.f32 %v43, %v45
    %v48 = vmul.f32 %v44, %v46
    %v49 = vpack.c.bf16 %v48, %v47
    %v50 = vpack.c.bf16 %v44, %v43
    %v51 = vpack.c.bf16 %v46, %v45
    %v52 = vld [vmem:[%s2] sm:$0xf]
    %v53 = vld [vmem:[%s2 + $0x4] sm:$0xf]
    %v54 = vld [vmem:[%s2 + $0x8] sm:$0xf]
    %v55 = vld [vmem:[%s2 + $0xc] sm:$0xf]
    %v56 = vld [vmem:[%s3] sm:$0xf]
    %v57 = vld [vmem:[%s3 + $0x4] sm:$0xf]
    %v58 = vld [vmem:[%s3 + $0x8] sm:$0xf]
    %v59 = vld [vmem:[%s3 + $0xc] sm:$0xf]
    %v64 = vunpack.c.l.b16 %v56
    %v65 = vunpack.c.l.b16 %v57
    %v66 = vunpack.c.l.b16 %v58
    %v67 = vunpack.c.l.b16 %v59
    %v68 = vpack.c.b16 %v65, %v64
    %v69 = vpack.c.b16 %v67, %v66
    %vm72 = vcmask 261120
    %v74 = vsel %vm72, %v50, 0
    %76 = vmatprep.subr.bf16.mxu0 0
    %77 = vmatpush1.bf16.msra.mxu0 %v68
    %78 = vmatprep.subr.bf16.mxu0 0
    %79 = vmatpush1.bf16.msra.mxu0 %v69
    %80 = vmatprep.subr.bf16.mxu0 0
    %81 = vmatpush1.bf16.msra.mxu0 0
    %82 = vmatprep.subr.bf16.mxu0 0
    %83 = vmatpush1.bf16.msra.mxu0 0
    %84 = vmatprep.subr.bf16.mxu0 0
    %85 = vmatpush1.bf16.msra.mxu0 0
    %86 = vmatprep.subr.bf16.mxu0 0
    %87 = vmatpush1.bf16.msra.mxu0 0
    %88 = vmatprep.subr.bf16.mxu0 0
    %89 = vmatpush1.bf16.msra.mxu0 0
    %90 = vmatprep.subr.bf16.mxu0 0
    %91 = vmatpush1.bf16.msra.mxu0 0
    %92 = vmatprep.subr.bf16.mxu0 0
    %93 = vmatpush1.bf16.msra.mxu0 0
    %94 = vmatprep.subr.bf16.mxu0 0
    %95 = vmatpush1.bf16.msra.mxu0 0
    %96 = vmatprep.subr.bf16.mxu0 0
    %97 = vmatpush1.bf16.msra.mxu0 0
    %98 = vmatprep.subr.bf16.mxu0 0
    %99 = vmatpush1.bf16.msra.mxu0 0
    %100 = vmatprep.subr.bf16.mxu0 0
    %101 = vmatpush1.bf16.msra.mxu0 0
    %102 = vmatprep.subr.bf16.mxu0 0
    %103 = vmatpush1.bf16.msra.mxu0 0
    %104 = vmatprep.subr.bf16.mxu0 0
    %105 = vmatpush1.bf16.msra.mxu0 0
    %106 = vmatprep.subr.bf16.mxu0 0
    %107 = vmatpush1.bf16.msra.mxu0 0
    %108 = vmatprep.mubr.bf16.mxu0 0
    %109 = vmatmul.mubr.bf16.gmra.mrb[0].mxu0 %v74
    %v110 = vpop.f32.mrb[0].mxu0
    %v111 = vadd.f32 0.0, %v110
    %v112 = vpop.f32.mrb[0].mxu0
    %v113 = vpop.f32.mrb[0].mxu0
    %v114 = vadd.f32 0.0, %v113
    %v115 = vpop.f32.mrb[0].mxu0
    %116 = vdwg.mxu0
    %v121 = vunpack.c.l.b16 %v52
    %v122 = vunpack.c.l.b16 %v53
    %v123 = vunpack.c.l.b16 %v54
    %v124 = vunpack.c.l.b16 %v55
    %v125 = vpack.c.b16 %v122, %v121
    %v126 = vpack.c.b16 %v124, %v123
    %v130 = vsel %vm72, %v49, 0
    %132 = vmatprep.subr.bf16.mxu0 0
    %133 = vmatpush1.bf16.msra.mxu0 %v125
    %134 = vmatprep.subr.bf16.mxu0 0
    %135 = vmatpush1.bf16.msra.mxu0 %v126
    %136 = vmatprep.subr.bf16.mxu0 0
    %137 = vmatpush1.bf16.msra.mxu0 0
    %138 = vmatprep.subr.bf16.mxu0 0
    %139 = vmatpush1.bf16.msra.mxu0 0
    %140 = vmatprep.subr.bf16.mxu0 0
    %141 = vmatpush1.bf16.msra.mxu0 0
    %142 = vmatprep.subr.bf16.mxu0 0
    %143 = vmatpush1.bf16.msra.mxu0 0
    %144 = vmatprep.subr.bf16.mxu0 0
    %145 = vmatpush1.bf16.msra.mxu0 0
    %146 = vmatprep.subr.bf16.mxu0 0
    %147 = vmatpush1.bf16.msra.mxu0 0
    %148 = vmatprep.subr.bf16.mxu0 0
    %149 = vmatpush1.bf16.msra.mxu0 0
    %150 = vmatprep.subr.bf16.mxu0 0
    %151 = vmatpush1.bf16.msra.mxu0 0
    %152 = vmatprep.subr.bf16.mxu0 0
    %153 = vmatpush1.bf16.msra.mxu0 0
    %154 = vmatprep.subr.bf16.mxu0 0
    %155 = vmatpush1.bf16.msra.mxu0 0
    %156 = vmatprep.subr.bf16.mxu0 0
    %157 = vmatpush1.bf16.msra.mxu0 0
    %158 = vmatprep.subr.bf16.mxu0 0
    %159 = vmatpush1.bf16.msra.mxu0 0
    %160 = vmatprep.subr.bf16.mxu0 0
    %161 = vmatpush1.bf16.msra.mxu0 0
    %162 = vmatprep.subr.bf16.mxu0 0
    %163 = vmatpush1.bf16.msra.mxu0 0
    %164 = vmatprep.mubr.bf16.mxu0 0
    %165 = vmatmul.mubr.bf16.gmra.mrb[0].mxu0 %v130
    %v166 = vpop.f32.mrb[0].mxu0
    %v167 = vadd.f32 %v111, %v166
    %v168 = vpop.f32.mrb[0].mxu0
    %v169 = vpop.f32.mrb[0].mxu0
    %v170 = vadd.f32 %v114, %v169
    %v171 = vpop.f32.mrb[0].mxu0
    %172 = vdwg.mxu0
    %v173 = vld [vmem:[%s4] sm:$0x1]
    %v175 = vlaneseq
    %v176 = vshrl.u32 %v175, 7
    %v177 = vsub.s32 0, %v176
    %v178 = vrot.slane %v173, %v177
    %v180 = vadd.f32 %v167, %v178
    %v181 = vadd.f32 %v170, %v178
    %v182 = vld [vmem:[%s5] sm:$0xf]
    %v183 = vld [vmem:[%s5 + $0x4] sm:$0xf]
    %v184 = vld [vmem:[%s5 + $0x8] sm:$0xf]
    %v185 = vld [vmem:[%s5 + $0xc] sm:$0xf]
    %v186 = vld [vmem:[%s6] sm:$0xf]
    %v187 = vld [vmem:[%s6 + $0x4] sm:$0xf]
    %v188 = vld [vmem:[%s6 + $0x8] sm:$0xf]
    %v189 = vld [vmem:[%s6 + $0xc] sm:$0xf]
    %v194 = vunpack.c.l.b16 %v186
    %v195 = vunpack.c.l.b16 %v187
    %v196 = vunpack.c.l.b16 %v188
    %v197 = vunpack.c.l.b16 %v189
    %v198 = vpack.c.b16 %v195, %v194
    %v199 = vpack.c.b16 %v197, %v196
    %v203 = vsel %vm72, %v51, 0
    %205 = vmatprep.subr.bf16.mxu0 0
    %206 = vmatpush1.bf16.msra.mxu0 %v198
    %207 = vmatprep.subr.bf16.mxu0 0
    %208 = vmatpush1.bf16.msra.mxu0 %v199
    %209 = vmatprep.subr.bf16.mxu0 0
    %210 = vmatpush1.bf16.msra.mxu0 0
    %211 = vmatprep.subr.bf16.mxu0 0
    %212 = vmatpush1.bf16.msra.mxu0 0
    %213 = vmatprep.subr.bf16.mxu0 0
    %214 = vmatpush1.bf16.msra.mxu0 0
    %215 = vmatprep.subr.bf16.mxu0 0
    %216 = vmatpush1.bf16.msra.mxu0 0
    %217 = vmatprep.subr.bf16.mxu0 0
    %218 = vmatpush1.bf16.msra.mxu0 0
    %219 = vmatprep.subr.bf16.mxu0 0
    %220 = vmatpush1.bf16.msra.mxu0 0
    %221 = vmatprep.subr.bf16.mxu0 0
    %222 = vmatpush1.bf16.msra.mxu0 0
    %223 = vmatprep.subr.bf16.mxu0 0
    %224 = vmatpush1.bf16.msra.mxu0 0
    %225 = vmatprep.subr.bf16.mxu0 0
    %226 = vmatpush1.bf16.msra.mxu0 0
    %227 = vmatprep.subr.bf16.mxu0 0
    %228 = vmatpush1.bf16.msra.mxu0 0
    %229 = vmatprep.subr.bf16.mxu0 0
    %230 = vmatpush1.bf16.msra.mxu0 0
    %231 = vmatprep.subr.bf16.mxu0 0
    %232 = vmatpush1.bf16.msra.mxu0 0
    %233 = vmatprep.subr.bf16.mxu0 0
    %234 = vmatpush1.bf16.msra.mxu0 0
    %235 = vmatprep.subr.bf16.mxu0 0
    %236 = vmatpush1.bf16.msra.mxu0 0
    %237 = vmatprep.mubr.bf16.mxu0 0
    %238 = vmatmul.mubr.bf16.gmra.mrb[0].mxu0 %v203
    %v239 = vpop.f32.mrb[0].mxu0
    %v240 = vadd.f32 0.0, %v239
    %v241 = vpop.f32.mrb[0].mxu0
    %v242 = vpop.f32.mrb[0].mxu0
    %v243 = vadd.f32 0.0, %v242
    %v244 = vpop.f32.mrb[0].mxu0
    %245 = vdwg.mxu0
    %v250 = vunpack.c.l.b16 %v182
    %v251 = vunpack.c.l.b16 %v183
    %v252 = vunpack.c.l.b16 %v184
    %v253 = vunpack.c.l.b16 %v185
    %v254 = vpack.c.b16 %v251, %v250
    %v255 = vpack.c.b16 %v253, %v252
    %258 = vmatprep.subr.bf16.mxu0 0
    %259 = vmatpush1.bf16.msra.mxu0 %v254
    %260 = vmatprep.subr.bf16.mxu0 0
    %261 = vmatpush1.bf16.msra.mxu0 %v255
    %262 = vmatprep.subr.bf16.mxu0 0
    %263 = vmatpush1.bf16.msra.mxu0 0
    %264 = vmatprep.subr.bf16.mxu0 0
    %265 = vmatpush1.bf16.msra.mxu0 0
    %266 = vmatprep.subr.bf16.mxu0 0
    %267 = vmatpush1.bf16.msra.mxu0 0
    %268 = vmatprep.subr.bf16.mxu0 0
    %269 = vmatpush1.bf16.msra.mxu0 0
    %270 = vmatprep.subr.bf16.mxu0 0
    %271 = vmatpush1.bf16.msra.mxu0 0
    %272 = vmatprep.subr.bf16.mxu0 0
    %273 = vmatpush1.bf16.msra.mxu0 0
    %274 = vmatprep.subr.bf16.mxu0 0
    %275 = vmatpush1.bf16.msra.mxu0 0
    %276 = vmatprep.subr.bf16.mxu0 0
    %277 = vmatpush1.bf16.msra.mxu0 0
    %278 = vmatprep.subr.bf16.mxu0 0
    %279 = vmatpush1.bf16.msra.mxu0 0
    %280 = vmatprep.subr.bf16.mxu0 0
    %281 = vmatpush1.bf16.msra.mxu0 0
    %282 = vmatprep.subr.bf16.mxu0 0
    %283 = vmatpush1.bf16.msra.mxu0 0
    %284 = vmatprep.subr.bf16.mxu0 0
    %285 = vmatpush1.bf16.msra.mxu0 0
    %286 = vmatprep.subr.bf16.mxu0 0
    %287 = vmatpush1.bf16.msra.mxu0 0
    %288 = vmatprep.subr.bf16.mxu0 0
    %289 = vmatpush1.bf16.msra.mxu0 0
    %290 = vmatprep.mubr.bf16.mxu0 0
    %291 = vmatmul.mubr.bf16.gmra.mrb[0].mxu0 %v130
    %v292 = vpop.f32.mrb[0].mxu0
    %v293 = vadd.f32 %v240, %v292
    %v294 = vpop.f32.mrb[0].mxu0
    %v295 = vpop.f32.mrb[0].mxu0
    %v296 = vadd.f32 %v243, %v295
    %v297 = vpop.f32.mrb[0].mxu0
    %298 = vdwg.mxu0
    %v299 = vld [vmem:[%s7] sm:$0x1]
    %v301 = vlaneseq
    %v302 = vshrl.u32 %v301, 7
    %v303 = vsub.s32 0, %v302
    %v304 = vrot.slane %v299, %v303
    %v306 = vadd.f32 %v293, %v304
    %v307 = vadd.f32 %v296, %v304
    %v308 = vmax.f32 %v180, 0.0
    %v309 = vmax.f32 %v181, 0.0
    %v310 = vmax.f32 %v306, 0.0
    %v311 = vmax.f32 %v307, 0.0
    %v312 = vsub.f32 %v310, %v308
    %v313 = vsub.f32 %v311, %v309
    %v314 = vpack.c.bf16 %v313, %v312
    %v315 = vld [vmem:[%s8] sm:$0xf]
    %v316 = vld [vmem:[%s8 + $0x4] sm:$0xf]
    %v317 = vld [vmem:[%s8 + $0x8] sm:$0xf]
    %v318 = vld [vmem:[%s8 + $0xc] sm:$0xf]
    %v319 = vld [vmem:[%s9] sm:$0xf]
    %v320 = vld [vmem:[%s9 + $0x4] sm:$0xf]
    %v321 = vld [vmem:[%s9 + $0x8] sm:$0xf]
    %v322 = vld [vmem:[%s9 + $0xc] sm:$0xf]
    %v327 = vunpack.c.l.b16 %v319
    %v328 = vunpack.c.l.b16 %v320
    %v329 = vunpack.c.l.b16 %v321
    %v330 = vunpack.c.l.b16 %v322
    %v331 = vpack.c.b16 %v328, %v327
    %v332 = vpack.c.b16 %v330, %v329
    %v336 = vsel %vm72, %v314, 0
    %338 = vmatprep.subr.bf16.mxu0 0
    %339 = vmatpush1.bf16.msra.mxu0 %v331
    %340 = vmatprep.subr.bf16.mxu0 0
    %341 = vmatpush1.bf16.msra.mxu0 %v332
    %342 = vmatprep.subr.bf16.mxu0 0
    %343 = vmatpush1.bf16.msra.mxu0 0
    %344 = vmatprep.subr.bf16.mxu0 0
    %345 = vmatpush1.bf16.msra.mxu0 0
    %346 = vmatprep.subr.bf16.mxu0 0
    %347 = vmatpush1.bf16.msra.mxu0 0
    %348 = vmatprep.subr.bf16.mxu0 0
    %349 = vmatpush1.bf16.msra.mxu0 0
    %350 = vmatprep.subr.bf16.mxu0 0
    %351 = vmatpush1.bf16.msra.mxu0 0
    %352 = vmatprep.subr.bf16.mxu0 0
    %353 = vmatpush1.bf16.msra.mxu0 0
    %354 = vmatprep.subr.bf16.mxu0 0
    %355 = vmatpush1.bf16.msra.mxu0 0
    %356 = vmatprep.subr.bf16.mxu0 0
    %357 = vmatpush1.bf16.msra.mxu0 0
    %358 = vmatprep.subr.bf16.mxu0 0
    %359 = vmatpush1.bf16.msra.mxu0 0
    %360 = vmatprep.subr.bf16.mxu0 0
    %361 = vmatpush1.bf16.msra.mxu0 0
    %362 = vmatprep.subr.bf16.mxu0 0
    %363 = vmatpush1.bf16.msra.mxu0 0
    %364 = vmatprep.subr.bf16.mxu0 0
    %365 = vmatpush1.bf16.msra.mxu0 0
    %366 = vmatprep.subr.bf16.mxu0 0
    %367 = vmatpush1.bf16.msra.mxu0 0
    %368 = vmatprep.subr.bf16.mxu0 0
    %369 = vmatpush1.bf16.msra.mxu0 0
    %370 = vmatprep.mubr.bf16.mxu0 0
    %371 = vmatmul.mubr.bf16.gmra.mrb[0].mxu0 %v336
    %v372 = vpop.f32.mrb[0].mxu0
    %v373 = vadd.f32 0.0, %v372
    %v374 = vpop.f32.mrb[0].mxu0
    %v375 = vpop.f32.mrb[0].mxu0
    %v376 = vadd.f32 0.0, %v375
    %v377 = vpop.f32.mrb[0].mxu0
    %378 = vdwg.mxu0
    %v383 = vunpack.c.l.b16 %v315
    %v384 = vunpack.c.l.b16 %v316
    %v385 = vunpack.c.l.b16 %v317
    %v386 = vunpack.c.l.b16 %v318
    %v387 = vpack.c.b16 %v384, %v383
    %v388 = vpack.c.b16 %v386, %v385
    %391 = vmatprep.subr.bf16.mxu0 0
    %392 = vmatpush1.bf16.msra.mxu0 %v387
    %393 = vmatprep.subr.bf16.mxu0 0
    %394 = vmatpush1.bf16.msra.mxu0 %v388
    %395 = vmatprep.subr.bf16.mxu0 0
    %396 = vmatpush1.bf16.msra.mxu0 0
    %397 = vmatprep.subr.bf16.mxu0 0
    %398 = vmatpush1.bf16.msra.mxu0 0
    %399 = vmatprep.subr.bf16.mxu0 0
    %400 = vmatpush1.bf16.msra.mxu0 0
    %401 = vmatprep.subr.bf16.mxu0 0
    %402 = vmatpush1.bf16.msra.mxu0 0
    %403 = vmatprep.subr.bf16.mxu0 0
    %404 = vmatpush1.bf16.msra.mxu0 0
    %405 = vmatprep.subr.bf16.mxu0 0
    %406 = vmatpush1.bf16.msra.mxu0 0
    %407 = vmatprep.subr.bf16.mxu0 0
    %408 = vmatpush1.bf16.msra.mxu0 0
    %409 = vmatprep.subr.bf16.mxu0 0
    %410 = vmatpush1.bf16.msra.mxu0 0
    %411 = vmatprep.subr.bf16.mxu0 0
    %412 = vmatpush1.bf16.msra.mxu0 0
    %413 = vmatprep.subr.bf16.mxu0 0
    %414 = vmatpush1.bf16.msra.mxu0 0
    %415 = vmatprep.subr.bf16.mxu0 0
    %416 = vmatpush1.bf16.msra.mxu0 0
    %417 = vmatprep.subr.bf16.mxu0 0
    %418 = vmatpush1.bf16.msra.mxu0 0
    %419 = vmatprep.subr.bf16.mxu0 0
    %420 = vmatpush1.bf16.msra.mxu0 0
    %421 = vmatprep.subr.bf16.mxu0 0
    %422 = vmatpush1.bf16.msra.mxu0 0
    %423 = vmatprep.mubr.bf16.mxu0 0
    %424 = vmatmul.mubr.bf16.gmra.mrb[0].mxu0 %v74
    %v425 = vpop.f32.mrb[0].mxu0
    %v426 = vadd.f32 %v373, %v425
    %v427 = vpop.f32.mrb[0].mxu0
    %v428 = vpop.f32.mrb[0].mxu0
    %v429 = vadd.f32 %v376, %v428
    %v430 = vpop.f32.mrb[0].mxu0
    %431 = vdwg.mxu0
    %v432 = vld [vmem:[%s10] sm:$0xf]
    %v433 = vld [vmem:[%s10 + $0x4] sm:$0xf]
    %v434 = vld [vmem:[%s10 + $0x8] sm:$0xf]
    %v435 = vld [vmem:[%s10 + $0xc] sm:$0xf]
    %v440 = vunpack.c.l.b16 %v432
    %v441 = vunpack.c.l.b16 %v433
    %v442 = vunpack.c.l.b16 %v434
    %v443 = vunpack.c.l.b16 %v435
    %v444 = vpack.c.b16 %v441, %v440
    %v445 = vpack.c.b16 %v443, %v442
    %448 = vmatprep.subr.bf16.mxu0 0
    %449 = vmatpush1.bf16.msra.mxu0 %v444
    %450 = vmatprep.subr.bf16.mxu0 0
    %451 = vmatpush1.bf16.msra.mxu0 %v445
    %452 = vmatprep.subr.bf16.mxu0 0
    %453 = vmatpush1.bf16.msra.mxu0 0
    %454 = vmatprep.subr.bf16.mxu0 0
    %455 = vmatpush1.bf16.msra.mxu0 0
    %456 = vmatprep.subr.bf16.mxu0 0
    %457 = vmatpush1.bf16.msra.mxu0 0
    %458 = vmatprep.subr.bf16.mxu0 0
    %459 = vmatpush1.bf16.msra.mxu0 0
    %460 = vmatprep.subr.bf16.mxu0 0
    %461 = vmatpush1.bf16.msra.mxu0 0
    %462 = vmatprep.subr.bf16.mxu0 0
    %463 = vmatpush1.bf16.msra.mxu0 0
    %464 = vmatprep.subr.bf16.mxu0 0
    %465 = vmatpush1.bf16.msra.mxu0 0
    %466 = vmatprep.subr.bf16.mxu0 0
    %467 = vmatpush1.bf16.msra.mxu0 0
    %468 = vmatprep.subr.bf16.mxu0 0
    %469 = vmatpush1.bf16.msra.mxu0 0
    %470 = vmatprep.subr.bf16.mxu0 0
    %471 = vmatpush1.bf16.msra.mxu0 0
    %472 = vmatprep.subr.bf16.mxu0 0
    %473 = vmatpush1.bf16.msra.mxu0 0
    %474 = vmatprep.subr.bf16.mxu0 0
    %475 = vmatpush1.bf16.msra.mxu0 0
    %476 = vmatprep.subr.bf16.mxu0 0
    %477 = vmatpush1.bf16.msra.mxu0 0
    %478 = vmatprep.subr.bf16.mxu0 0
    %479 = vmatpush1.bf16.msra.mxu0 0
    %480 = vmatprep.mubr.bf16.mxu0 0
    %481 = vmatmul.mubr.bf16.gmra.mrb[0].mxu0 %v203
    %v482 = vpop.f32.mrb[0].mxu0
    %v483 = vadd.f32 0.0, %v482
    %v484 = vpop.f32.mrb[0].mxu0
    %v485 = vpop.f32.mrb[0].mxu0
    %v486 = vadd.f32 0.0, %v485
    %v487 = vpop.f32.mrb[0].mxu0
    %488 = vdwg.mxu0
    %v489 = vadd.f32 %v426, %v483
    %v490 = vadd.f32 %v429, %v486
    %v491 = vld [vmem:[%s11] sm:$0x1]
    %v493 = vlaneseq
    %v494 = vshrl.u32 %v493, 7
    %v495 = vsub.s32 0, %v494
    %v496 = vrot.slane %v491, %v495
    %v498 = vadd.f32 %v489, %v496
    %v499 = vadd.f32 %v490, %v496
    %v500 = vmax.f32 %v498, 0.0
    %v501 = vmax.f32 %v499, 0.0
    %v502 = vpack.c.bf16 %v501, %v500
    %v504 = vunpack.c.l.b16 %v502
    %v505 = vunpack.c.h.b16 %v502
    %v506 = vpack.c.b16 %v504, %v504
    %v507 = vpack.c.b16 %v505, %v505
    %vm510 = vcmask 257024
    %511 = vst.msk [vmem:[#allocation2] sm:$0xf] %vm510, %v506
    %512 = vst.msk [vmem:[#allocation2 + $0x4] sm:$0xf] %vm510, %v507
    // Predicated region
    $region50: #{fusdiff_forward.1} parent=1 // pred_check
      _
    $region51: #{fusdiff_forward.1} parent=1 // pred_check_branch
      %514 = sbr.rel (0) target = $region53
    $region52: #{fusdiff_forward.1} parent=1 // pred_region
      %s516 = ssub.s32 128, 128
      %517 = vsyncadd [#allocation3], %s516
      %s518 = sshll.u32 [#allocation2], 4
      %s519 = int_to_ptr.vmem [resolvable:$true] %s518
      %524 = dma.vmem_to_hbm [thread:$0]  %s519, 128, %s12, [#allocation3], 64, 64, 4
    $region53: #{fusdiff_forward.1} parent=1 // pred_fallthru
      _
    // Predicated region
    $region54: #{fusdiff_forward.1} parent=1 // pred_check
      _
    $region55: #{fusdiff_forward.1} parent=1 // pred_check_branch
      %526 = sbr.rel (0) target = $region57
    $region56: #{fusdiff_forward.1} parent=1 // pred_region
      %527 = dma.done [#allocation3], 128
    $region57: #{fusdiff_forward.1} parent=1 // pred_fallthru
      _
    %528 = vsyncpa [#allocation3], 1

</llo_original>
